<compile_context>
chip_gen: v5e
topology: v5e:2x2
jax: 0.10.0
libtpu: 0.0.40
codegen_flags: <defaults>
</compile_context>

<pallas_src>
import functools

import jax
import jax.numpy as jnp
import numpy as np
from jax import lax
from jax.experimental import pallas as pl
from jax.experimental.pallas import tpu as pltpu

_EPS = 1e-5                      # torch.nn.InstanceNorm2d default eps
_INV_SQRT2 = 0.7071067811865476
_SQRT_2_OVER_PI = 0.7978845608028654


def _gelu(x, approximate):
    if approximate:
        # tanh-approximate GELU: the transcendental runs on the EUP slot.
        return 0.5 * x * (1.0 + jnp.tanh(_SQRT_2_OVER_PI * (x + 0.044715 * x * x * x)))
    # exact (erf-based) GELU, matching torch.nn.GELU() default
    return 0.5 * x * (1.0 + lax.erf(x * _INV_SQRT2))


def _instance_norm(h, gamma, beta):
    # h: (R, HW); gamma/beta: (R, 1). Biased variance over the spatial lanes.
    # sum and sum-of-squares issue as two independent lane reductions.
    n = h.shape[-1]
    inv_n = 1.0 / n
    s1 = jnp.sum(h, axis=-1, keepdims=True)
    s2 = jnp.sum(h * h, axis=-1, keepdims=True)
    mean = s1 * inv_n
    var = jnp.maximum(s2 * inv_n - mean * mean, 0.0)
    return (h - mean) * lax.rsqrt(var + _EPS) * gamma + beta


def _dsconv_kernel(BtC, BtO, H, W, strided, has_skip_proj, use_roll,
                   approximate_gelu, compute_dtype, *refs):
    f32 = jnp.float32
    refs = list(refs)
    if strided:
        taps_ref = refs.pop(0)
    else:
        x_ref = refs.pop(0)
        masks_ref = refs.pop(0)
    w9_ref, g1_ref, b1_ref, wpw_ref, g2_ref, b2_ref = refs[:6]
    refs = refs[6:]
    if has_skip_proj:
        wsk_ref, g3_ref, b3_ref = refs[:3]
        refs = refs[3:]
    out_ref = refs.pop(0)
    halo_ref = refs[0] if refs else None

    def w(t):                         # per-row depthwise tap weight, (BtC, 1)
        return w9_ref[t]

    # ---- depthwise 3x3 conv ---------------------------------------------------
    if strided:
        # taps gathered in the wrapper at output positions: no wasted work.
        acc = w(0) * taps_ref[0].astype(f32)
        for t in range(1, 9):
            acc = acc + w(t) * taps_ref[t].astype(f32)
        xs = taps_ref[4].astype(f32)              # x subsampled at stride (skip input)
    else:
        HW = H * W
        x = x_ref[...].astype(f32)                # (BtC, HW)
        mask_l = masks_ref[0]                     # (1, HW): 0 where col == 0
        mask_r = masks_ref[1]                     # (1, HW): 0 where col == W-1
        mask_t = masks_ref[2]                     # (1, HW): 0 where row == 0
        mask_b = masks_ref[3]                     # (1, HW): 0 where row == H-1
        if use_roll:
            def sh(k):                            # y[:, p] = x[:, (p + k) % HW]
                if k == 0:
                    return x
                return pltpu.roll(x, shift=(-k) % HW, axis=1)
            up = (w(0) * sh(-W - 1) * mask_l + w(1) * sh(-W)
                  + w(2) * sh(-W + 1) * mask_r)
            mid = (w(3) * sh(-1) * mask_l + w(4) * x + w(5) * sh(1) * mask_r)
            dn = (w(6) * sh(W - 1) * mask_l + w(7) * sh(W)
                  + w(8) * sh(W + 1) * mask_r)
            acc = mask_t * up + mid + mask_b * dn
        else:
            # fallback (HW not a multiple of 128): zero-haloed flat copy in VMEM.
            pad = W + 1
            zeros = jnp.zeros((BtC, pad), f32)
            halo_ref[:, pl.ds(0, pad)] = zeros
            halo_ref[:, pl.ds(pad + HW, pad)] = zeros
            halo_ref[:, pl.ds(pad, HW)] = x
            def tapk(k):
                return halo_ref[:, pl.ds(pad + k, HW)]
            up = (w(0) * tapk(-W - 1) * mask_l + w(1) * tapk(-W)
                  + w(2) * tapk(-W + 1) * mask_r)
            mid = (w(3) * tapk(-1) * mask_l + w(4) * x + w(5) * tapk(1) * mask_r)
            dn = (w(6) * tapk(W - 1) * mask_l + w(7) * tapk(W)
                  + w(8) * tapk(W + 1) * mask_r)
            acc = up + mid + dn
        xs = x

    # ---- conv path: IN -> GELU -> 1x1 (MXU, block-diag) -> IN -> GELU ----------
    h = _gelu(_instance_norm(acc, g1_ref[...], b1_ref[...]), approximate_gelu)
    y = jnp.dot(wpw_ref[...], h.astype(compute_dtype),
                preferred_element_type=f32)                    # (BtO, HWo)
    y = _gelu(_instance_norm(y, g2_ref[...], b2_ref[...]), approximate_gelu)

    # ---- skip path --------------------------------------------------------------
    if has_skip_proj:
        sk = jnp.dot(wsk_ref[...], xs.astype(compute_dtype),
                     preferred_element_type=f32)               # (BtO, HWo)
        sk = _instance_norm(sk, g3_ref[...], b3_ref[...])
    else:
        sk = xs                                    # identity (C == O, stride == 1)

    out_ref[...] = (y + sk).astype(out_ref.dtype)  # lane-dense (BtO, HWo) store


def _pick_batch_block(B, C, O, HW, HWo, has_skip_proj):
    """Largest Bt whose packed block shapes are legal ((8,128) rule via
    Bt*C / Bt*O multiples of 8 or full extent), fit a conservative per-step
    VMEM budget (v7x-safe), preferring to keep >= 2 grid steps (megacore)."""
    legal = []
    for bt in range(1, B + 1):
        if B % bt:
            continue
        ok_c = (bt * C) % 8 == 0 or bt == B
        ok_o = (bt * O) % 8 == 0 or bt == B
        if ok_c and ok_o:
            legal.append(bt)
    budget = 12 << 20

    def step_bytes(bt):
        act = 4 * bt * (4 * C * HW + 3 * O * HWo)
        wts = 4 * bt * bt * C * O * (2 if has_skip_proj else 1)
        return act + wts

    good = [bt for bt in legal if step_bytes(bt) <= budget]
    if good:
        pref = [bt for bt in good if B // bt >= 2] or good
        return max(pref)
    return min(legal)


def depthwise_separable_conv(x, params, *, stride=1,
                             compute_dtype=jnp.bfloat16,
                             approximate_gelu=True,
                             batch_block=None):
    """x: (B, C, H, W) NCHW float32 (bf16 x is accepted and halves the x DMA;
    all VPU math stays in f32 in-kernel).  compute_dtype controls the MXU
    operand dtype of the two 1x1 convolutions (bf16 default, f32 accumulate).
    approximate_gelu=False restores exact torch.nn.GELU (erf) semantics."""
    B, C, H, W = x.shape
    w_dw = params["w_dw"]                          # (C, 3, 3)
    w_pw = params["w_pw"]                          # (O, C)
    O = w_pw.shape[0]
    has_skip_proj = (stride != 1) or (C != O)
    Ho = (H - 1) // stride + 1
    Wo = (W - 1) // stride + 1
    HW, HWo = H * W, Ho * Wo

    Bt = batch_block or _pick_batch_block(B, C, O, HW, HWo, has_skip_proj)
    assert B % Bt == 0, "batch_block must divide the batch size"
    G = B // Bt
    BtC, BtO = Bt * C, Bt * O
    strided = stride != 1
    use_roll = (not strided) and (HW % 128 == 0)

    # ---- tiny parameter glue (all wrapper-side, negligible) --------------------
    eye = jnp.eye(Bt, dtype=jnp.float32)
    w9 = jnp.tile(w_dw.reshape(C, 9).T.astype(jnp.float32), (1, Bt)).reshape(9, BtC, 1)
    g1 = jnp.tile(params["g1"].astype(jnp.float32), Bt).reshape(BtC, 1)
    b1 = jnp.tile(params["b1"].astype(jnp.float32), Bt).reshape(BtC, 1)
    w_pw_bd = jnp.kron(eye, w_pw.astype(jnp.float32)).astype(compute_dtype)
    g2 = jnp.tile(params["g2"].astype(jnp.float32), Bt).reshape(BtO, 1)
    b2 = jnp.tile(params["b2"].astype(jnp.float32), Bt).reshape(BtO, 1)

    def full_spec(shape):
        nd = len(shape)
        return pl.BlockSpec(shape, lambda n, _nd=nd: (0,) * _nd)

    if not strided:
        x2d = x.reshape(B * C, HW)                 # free (leading-dim) reshape
        pos = jnp.arange(HW, dtype=jnp.int32)
        col, row = pos % W, pos // W
        masks = jnp.stack([(col != 0), (col != W - 1),
                           (row != 0), (row != H - 1)]).astype(jnp.float32)
        masks = masks.reshape(4, 1, HW)
        in_specs = [pl.BlockSpec((BtC, HW), lambda n: (n, 0)),
                    full_spec((4, 1, HW))]
        args = [x2d, masks]
    else:
        # gather the 9 tap planes at output positions once (wrapper-side XLA):
        # taps[k, b*C + c, i*Wo + j] = x_pad[b, c, i*s + di, j*s + dj]
        x_pad = jnp.pad(x, ((0, 0), (0, 0), (1, 1), (1, 1)))
        tap_list = []
        for di in range(3):
            for dj in range(3):
                t = lax.slice(x_pad, (0, 0, di, dj),
                              (B, C, di + (Ho - 1) * stride + 1,
                               dj + (Wo - 1) * stride + 1),
                              (1, 1, stride, stride))
                tap_list.append(t.reshape(B * C, HWo))
        taps = jnp.stack(tap_list, axis=0)         # (9, B*C, HWo)
        in_specs = [pl.BlockSpec((9, BtC, HWo), lambda n: (0, n, 0))]
        args = [taps]

    in_specs += [full_spec((9, BtC, 1)),
                 full_spec((BtC, 1)), full_spec((BtC, 1)),
                 full_spec((BtO, BtC)),
                 full_spec((BtO, 1)), full_spec((BtO, 1))]
    args += [w9, g1, b1, w_pw_bd, g2, b2]
    if has_skip_proj:
        w_sk_bd = jnp.kron(eye, params["w_sk"].astype(jnp.float32)).astype(compute_dtype)
        g3 = jnp.tile(params["g3"].astype(jnp.float32), Bt).reshape(BtO, 1)
        b3 = jnp.tile(params["b3"].astype(jnp.float32), Bt).reshape(BtO, 1)
        in_specs += [full_spec((BtO, BtC)), full_spec((BtO, 1)), full_spec((BtO, 1))]
        args += [w_sk_bd, g3, b3]

    scratch_shapes = []
    if (not strided) and (not use_roll):
        scratch_shapes.append(pltpu.VMEM((BtC, HW + 2 * (W + 1)), jnp.float32))

    # VMEM limit from the actual footprint, with headroom (never the full 64 MiB
    # of a v7x TensorCore; caps at 100 MiB which is fine on v5e/v6e).
    itemsize = jnp.dtype(x.dtype).itemsize
    act_in = (9 * BtC * HWo if strided else BtC * HW) * itemsize
    act_out = BtO * HWo * itemsize
    halo_b = 0 if (strided or use_roll) else BtC * (HW + 2 * (W + 1)) * 4
    live = 6 * 4 * max(BtC * (HWo if strided else HW), BtO * HWo)
    need = 2 * (act_in + act_out) + halo_b + live + (1 << 20)
    vmem_limit = int(min(max(2 * need, 16 << 20), 100 << 20))

    kernel = functools.partial(_dsconv_kernel, BtC, BtO, H, W, strided,
                               has_skip_proj, use_roll, approximate_gelu,
                               compute_dtype)

    out2d = pl.pallas_call(
        kernel,
        out_shape=jax.ShapeDtypeStruct((B * O, HWo), x.dtype),
        grid=(G,),
        in_specs=in_specs,
        out_specs=pl.BlockSpec((BtO, HWo), lambda n: (n, 0)),
        scratch_shapes=scratch_shapes,
        compiler_params=pltpu.CompilerParams(
            dimension_semantics=("parallel",),
            vmem_limit_bytes=vmem_limit,
        ),
    )(*args)
    return out2d.reshape(B, O, Ho, Wo)


# ---------------- pure-JAX reference (for correctness check) ----------------
def _ref_instance_norm(h, gamma, beta):
    mean = jnp.mean(h, axis=(2, 3), keepdims=True)
    var = jnp.mean((h - mean) ** 2, axis=(2, 3), keepdims=True)
    return ((h - mean) * lax.rsqrt(var + _EPS)
            * gamma[None, :, None, None] + beta[None, :, None, None])


def _reference(x, params, *, stride=1, approximate_gelu=False):
    C = x.shape[1]
    O = params["w_pw"].shape[0]
    dn = ("NCHW", "OIHW", "NCHW")
    h = lax.conv_general_dilated(
        x, params["w_dw"].reshape(C, 1, 3, 3), (stride, stride),
        ((1, 1), (1, 1)), dimension_numbers=dn, feature_group_count=C)
    h = _gelu(_ref_instance_norm(h, params["g1"], params["b1"]), approximate_gelu)
    h = lax.conv_general_dilated(
        h, params["w_pw"].reshape(O, C, 1, 1), (1, 1), ((0, 0), (0, 0)),
        dimension_numbers=dn)
    h = _gelu(_ref_instance_norm(h, params["g2"], params["b2"]), approximate_gelu)
    if stride != 1 or C != O:
        sk = lax.conv_general_dilated(
            x, params["w_sk"].reshape(O, C, 1, 1), (stride, stride),
            ((0, 0), (0, 0)), dimension_numbers=dn)
        sk = _ref_instance_norm(sk, params["g3"], params["b3"])
    else:
        sk = x
    return h + sk


def _make_params(key, C, O, with_skip):
    ks = jax.random.split(key, 10)
    p = {
        "w_dw": 0.3 * jax.random.normal(ks[0], (C, 3, 3), jnp.float32),
        "g1": 1.0 + 0.1 * jax.random.normal(ks[1], (C,), jnp.float32),
        "b1": 0.1 * jax.random.normal(ks[2], (C,), jnp.float32),
        "w_pw": 0.3 * jax.random.normal(ks[3], (O, C), jnp.float32),
        "g2": 1.0 + 0.1 * jax.random.normal(ks[4], (O,), jnp.float32),
        "b2": 0.1 * jax.random.normal(ks[5], (O,), jnp.float32),
    }
    if with_skip:
        p["w_sk"] = 0.3 * jax.random.normal(ks[6], (O, C), jnp.float32)
        p["g3"] = 1.0 + 0.1 * jax.random.normal(ks[7], (O,), jnp.float32)
        p["b3"] = 0.1 * jax.random.normal(ks[8], (O,), jnp.float32)
    return p


if __name__ == "__main__":
    key = jax.random.PRNGKey(0)
    ks = jax.random.split(key, 6)
    B, C, O, H, W = 2, 4, 8, 16, 16

    # case 1: projection skip (C != O), stride=1 — exact erf GELU + f32 MXU
    # operands: strict parity with the torch-equivalent reference.
    x1 = jax.random.normal(ks[0], (B, C, H, W), jnp.float32)
    p1 = _make_params(ks[1], C, O, with_skip=True)
    out1 = jax.block_until_ready(depthwise_separable_conv(
        x1, p1, stride=1, compute_dtype=jnp.float32, approximate_gelu=False))
    assert out1.shape == (B, O, H, W), out1.shape
    ref1 = _reference(x1, p1, stride=1, approximate_gelu=False)
    np.testing.assert_allclose(np.asarray(out1), np.asarray(ref1),
                               atol=1e-2, rtol=1e-2)

    # case 2: identity skip (C == O), stride=1 — performance defaults
    # (tanh GELU on the EUP, bf16 MXU operands).
    C2 = O2 = 4
    x2 = jax.random.normal(ks[2], (B, C2, H, W), jnp.float32)
    p2 = _make_params(ks[3], C2, O2, with_skip=False)
    out2 = jax.block_until_ready(depthwise_separable_conv(x2, p2, stride=1))
    assert out2.shape == (B, O2, H, W), out2.shape
    ref2 = _reference(x2, p2, stride=1, approximate_gelu=True)
    np.testing.assert_allclose(np.asarray(out2), np.asarray(ref2),
                               atol=2e-2, rtol=2e-2)

    # case 3: stride=2 (projection skip) — wrapper-gathered tap-plane path.
    x3 = jax.random.normal(ks[4], (B, C, H, W), jnp.float32)
    p3 = _make_params(ks[5], C, O, with_skip=True)
    out3 = jax.block_until_ready(depthwise_separable_conv(x3, p3, stride=2))
    assert out3.shape == (B, O, H // 2, W // 2), out3.shape
    ref3 = _reference(x3, p3, stride=2, approximate_gelu=True)
    np.testing.assert_allclose(np.asarray(out3), np.asarray(ref3),
                               atol=3e-2, rtol=3e-2)

    print("KERNEL_OK")
</pallas_src>

<mosaic_0001>
module attributes {stable_mosaic.version = 11 : i64} {
  func.func @_dsconv_kernel(%arg0: i32, %arg1: memref<8x256xf32, #tpu.memory_space<vmem>>, %arg2: memref<4x1x256xf32, #tpu.memory_space<vmem>>, %arg3: memref<9x8x1xf32, #tpu.memory_space<vmem>>, %arg4: memref<8x1xf32, #tpu.memory_space<vmem>>, %arg5: memref<8x1xf32, #tpu.memory_space<vmem>>, %arg6: memref<16x8xf32, #tpu.memory_space<vmem>>, %arg7: memref<16x1xf32, #tpu.memory_space<vmem>>, %arg8: memref<16x1xf32, #tpu.memory_space<vmem>>, %arg9: memref<16x8xf32, #tpu.memory_space<vmem>>, %arg10: memref<16x1xf32, #tpu.memory_space<vmem>>, %arg11: memref<16x1xf32, #tpu.memory_space<vmem>>, %arg12: memref<16x256xf32, #tpu.memory_space<vmem>>) attributes {dimension_semantics = [#tpu.dimension_semantics<parallel>], iteration_bounds = array<i64: 1>, scalar_prefetch = 0 : i64, scratch_operands = 0 : i64, tpu.core_type = #tpu.core_type<tc>, window_params = [{transform_indices = @transform_0, window_bounds = array<i64: 8, 256>}, {pipeline_mode = #tpu.pipeline_mode<synchronous>, transform_indices = @transform_1, window_bounds = array<i64: 4, 1, 256>}, {pipeline_mode = #tpu.pipeline_mode<synchronous>, transform_indices = @transform_2, window_bounds = array<i64: 9, 8, 1>}, {pipeline_mode = #tpu.pipeline_mode<synchronous>, transform_indices = @transform_3, window_bounds = array<i64: 8, 1>}, {pipeline_mode = #tpu.pipeline_mode<synchronous>, transform_indices = @transform_4, window_bounds = array<i64: 8, 1>}, {pipeline_mode = #tpu.pipeline_mode<synchronous>, transform_indices = @transform_5, window_bounds = array<i64: 16, 8>}, {pipeline_mode = #tpu.pipeline_mode<synchronous>, transform_indices = @transform_6, window_bounds = array<i64: 16, 1>}, {pipeline_mode = #tpu.pipeline_mode<synchronous>, transform_indices = @transform_7, window_bounds = array<i64: 16, 1>}, {pipeline_mode = #tpu.pipeline_mode<synchronous>, transform_indices = @transform_8, window_bounds = array<i64: 16, 8>}, {pipeline_mode = #tpu.pipeline_mode<synchronous>, transform_indices = @transform_9, window_bounds = array<i64: 16, 1>}, {pipeline_mode = #tpu.pipeline_mode<synchronous>, transform_indices = @transform_10, window_bounds = array<i64: 16, 1>}, {transform_indices = @transform_11, window_bounds = array<i64: 16, 256>}]} {
    %c0 = arith.constant 0 : index
    %c0_0 = arith.constant 0 : index
    %0 = vector.load %arg1[%c0, %c0_0] : memref<8x256xf32, #tpu.memory_space<vmem>>, vector<8x256xf32>
    %c0_1 = arith.constant 0 : index
    %c0_2 = arith.constant 0 : index
    %c0_3 = arith.constant 0 : index
    %1 = vector.load %arg2[%c0_1, %c0_2, %c0_3] : memref<4x1x256xf32, #tpu.memory_space<vmem>>, vector<1x1x256xf32>
    %2 = vector.shape_cast %1 : vector<1x1x256xf32> to vector<1x256xf32>
    %c1 = arith.constant 1 : index
    %c0_4 = arith.constant 0 : index
    %c0_5 = arith.constant 0 : index
    %3 = vector.load %arg2[%c1, %c0_4, %c0_5] : memref<4x1x256xf32, #tpu.memory_space<vmem>>, vector<1x1x256xf32>
    %4 = vector.shape_cast %3 : vector<1x1x256xf32> to vector<1x256xf32>
    %c2 = arith.constant 2 : index
    %c0_6 = arith.constant 0 : index
    %c0_7 = arith.constant 0 : index
    %5 = vector.load %arg2[%c2, %c0_6, %c0_7] : memref<4x1x256xf32, #tpu.memory_space<vmem>>, vector<1x1x256xf32>
    %6 = vector.shape_cast %5 : vector<1x1x256xf32> to vector<1x256xf32>
    %c3 = arith.constant 3 : index
    %c0_8 = arith.constant 0 : index
    %c0_9 = arith.constant 0 : index
    %7 = vector.load %arg2[%c3, %c0_8, %c0_9] : memref<4x1x256xf32, #tpu.memory_space<vmem>>, vector<1x1x256xf32>
    %8 = vector.shape_cast %7 : vector<1x1x256xf32> to vector<1x256xf32>
    %c0_10 = arith.constant 0 : index
    %c0_11 = arith.constant 0 : index
    %c0_12 = arith.constant 0 : index
    %9 = vector.load %arg3[%c0_10, %c0_11, %c0_12] : memref<9x8x1xf32, #tpu.memory_space<vmem>>, vector<1x8x1xf32>
    %10 = vector.shape_cast %9 : vector<1x8x1xf32> to vector<8x1xf32>
    %c17_i32 = arith.constant 17 : i32
    %11 = tpu.dynamic_rotate %0 by %c17_i32 dim 1 : vector<8x256xf32>, i32 -> vector<8x256xf32>
    %12 = vector.broadcast %10 : vector<8x1xf32> to vector<8x256xf32>
    %13 = arith.mulf %12, %11 : vector<8x256xf32>
    %14 = vector.broadcast %2 : vector<1x256xf32> to vector<8x256xf32>
    %15 = arith.mulf %13, %14 : vector<8x256xf32>
    %c1_13 = arith.constant 1 : index
    %c0_14 = arith.constant 0 : index
    %c0_15 = arith.constant 0 : index
    %16 = vector.load %arg3[%c1_13, %c0_14, %c0_15] : memref<9x8x1xf32, #tpu.memory_space<vmem>>, vector<1x8x1xf32>
    %17 = vector.shape_cast %16 : vector<1x8x1xf32> to vector<8x1xf32>
    %c16_i32 = arith.constant 16 : i32
    %18 = tpu.dynamic_rotate %0 by %c16_i32 dim 1 : vector<8x256xf32>, i32 -> vector<8x256xf32>
    %19 = vector.broadcast %17 : vector<8x1xf32> to vector<8x256xf32>
    %20 = arith.mulf %19, %18 : vector<8x256xf32>
    %21 = arith.addf %15, %20 : vector<8x256xf32>
    %c2_16 = arith.constant 2 : index
    %c0_17 = arith.constant 0 : index
    %c0_18 = arith.constant 0 : index
    %22 = vector.load %arg3[%c2_16, %c0_17, %c0_18] : memref<9x8x1xf32, #tpu.memory_space<vmem>>, vector<1x8x1xf32>
    %23 = vector.shape_cast %22 : vector<1x8x1xf32> to vector<8x1xf32>
    %c15_i32 = arith.constant 15 : i32
    %24 = tpu.dynamic_rotate %0 by %c15_i32 dim 1 : vector<8x256xf32>, i32 -> vector<8x256xf32>
    %25 = vector.broadcast %23 : vector<8x1xf32> to vector<8x256xf32>
    %26 = arith.mulf %25, %24 : vector<8x256xf32>
    %27 = vector.broadcast %4 : vector<1x256xf32> to vector<8x256xf32>
    %28 = arith.mulf %26, %27 : vector<8x256xf32>
    %29 = arith.addf %21, %28 : vector<8x256xf32>
    %c3_19 = arith.constant 3 : index
    %c0_20 = arith.constant 0 : index
    %c0_21 = arith.constant 0 : index
    %30 = vector.load %arg3[%c3_19, %c0_20, %c0_21] : memref<9x8x1xf32, #tpu.memory_space<vmem>>, vector<1x8x1xf32>
    %31 = vector.shape_cast %30 : vector<1x8x1xf32> to vector<8x1xf32>
    %c1_i32 = arith.constant 1 : i32
    %32 = tpu.dynamic_rotate %0 by %c1_i32 dim 1 : vector<8x256xf32>, i32 -> vector<8x256xf32>
    %33 = vector.broadcast %31 : vector<8x1xf32> to vector<8x256xf32>
    %34 = arith.mulf %33, %32 : vector<8x256xf32>
    %35 = vector.broadcast %2 : vector<1x256xf32> to vector<8x256xf32>
    %36 = arith.mulf %34, %35 : vector<8x256xf32>
    %c4 = arith.constant 4 : index
    %c0_22 = arith.constant 0 : index
    %c0_23 = arith.constant 0 : index
    %37 = vector.load %arg3[%c4, %c0_22, %c0_23] : memref<9x8x1xf32, #tpu.memory_space<vmem>>, vector<1x8x1xf32>
    %38 = vector.shape_cast %37 : vector<1x8x1xf32> to vector<8x1xf32>
    %39 = vector.broadcast %38 : vector<8x1xf32> to vector<8x256xf32>
    %40 = arith.mulf %39, %0 : vector<8x256xf32>
    %41 = arith.addf %36, %40 : vector<8x256xf32>
    %c5 = arith.constant 5 : index
    %c0_24 = arith.constant 0 : index
    %c0_25 = arith.constant 0 : index
    %42 = vector.load %arg3[%c5, %c0_24, %c0_25] : memref<9x8x1xf32, #tpu.memory_space<vmem>>, vector<1x8x1xf32>
    %43 = vector.shape_cast %42 : vector<1x8x1xf32> to vector<8x1xf32>
    %c255_i32 = arith.constant 255 : i32
    %44 = tpu.dynamic_rotate %0 by %c255_i32 dim 1 : vector<8x256xf32>, i32 -> vector<8x256xf32>
    %45 = vector.broadcast %43 : vector<8x1xf32> to vector<8x256xf32>
    %46 = arith.mulf %45, %44 : vector<8x256xf32>
    %47 = vector.broadcast %4 : vector<1x256xf32> to vector<8x256xf32>
    %48 = arith.mulf %46, %47 : vector<8x256xf32>
    %49 = arith.addf %41, %48 : vector<8x256xf32>
    %c6 = arith.constant 6 : index
    %c0_26 = arith.constant 0 : index
    %c0_27 = arith.constant 0 : index
    %50 = vector.load %arg3[%c6, %c0_26, %c0_27] : memref<9x8x1xf32, #tpu.memory_space<vmem>>, vector<1x8x1xf32>
    %51 = vector.shape_cast %50 : vector<1x8x1xf32> to vector<8x1xf32>
    %c241_i32 = arith.constant 241 : i32
    %52 = tpu.dynamic_rotate %0 by %c241_i32 dim 1 : vector<8x256xf32>, i32 -> vector<8x256xf32>
    %53 = vector.broadcast %51 : vector<8x1xf32> to vector<8x256xf32>
    %54 = arith.mulf %53, %52 : vector<8x256xf32>
    %55 = vector.broadcast %2 : vector<1x256xf32> to vector<8x256xf32>
    %56 = arith.mulf %54, %55 : vector<8x256xf32>
    %c7 = arith.constant 7 : index
    %c0_28 = arith.constant 0 : index
    %c0_29 = arith.constant 0 : index
    %57 = vector.load %arg3[%c7, %c0_28, %c0_29] : memref<9x8x1xf32, #tpu.memory_space<vmem>>, vector<1x8x1xf32>
    %58 = vector.shape_cast %57 : vector<1x8x1xf32> to vector<8x1xf32>
    %c240_i32 = arith.constant 240 : i32
    %59 = tpu.dynamic_rotate %0 by %c240_i32 dim 1 : vector<8x256xf32>, i32 -> vector<8x256xf32>
    %60 = vector.broadcast %58 : vector<8x1xf32> to vector<8x256xf32>
    %61 = arith.mulf %60, %59 : vector<8x256xf32>
    %62 = arith.addf %56, %61 : vector<8x256xf32>
    %c8 = arith.constant 8 : index
    %c0_30 = arith.constant 0 : index
    %c0_31 = arith.constant 0 : index
    %63 = vector.load %arg3[%c8, %c0_30, %c0_31] : memref<9x8x1xf32, #tpu.memory_space<vmem>>, vector<1x8x1xf32>
    %64 = vector.shape_cast %63 : vector<1x8x1xf32> to vector<8x1xf32>
    %c239_i32 = arith.constant 239 : i32
    %65 = tpu.dynamic_rotate %0 by %c239_i32 dim 1 : vector<8x256xf32>, i32 -> vector<8x256xf32>
    %66 = vector.broadcast %64 : vector<8x1xf32> to vector<8x256xf32>
    %67 = arith.mulf %66, %65 : vector<8x256xf32>
    %68 = vector.broadcast %4 : vector<1x256xf32> to vector<8x256xf32>
    %69 = arith.mulf %67, %68 : vector<8x256xf32>
    %70 = arith.addf %62, %69 : vector<8x256xf32>
    %71 = vector.broadcast %6 : vector<1x256xf32> to vector<8x256xf32>
    %72 = arith.mulf %71, %29 : vector<8x256xf32>
    %73 = arith.addf %72, %49 : vector<8x256xf32>
    %74 = vector.broadcast %8 : vector<1x256xf32> to vector<8x256xf32>
    %75 = arith.mulf %74, %70 : vector<8x256xf32>
    %76 = arith.addf %73, %75 : vector<8x256xf32>
    %c0_32 = arith.constant 0 : index
    %c0_33 = arith.constant 0 : index
    %77 = vector.load %arg4[%c0_32, %c0_33] : memref<8x1xf32, #tpu.memory_space<vmem>>, vector<8x1xf32>
    %c0_34 = arith.constant 0 : index
    %c0_35 = arith.constant 0 : index
    %78 = vector.load %arg5[%c0_34, %c0_35] : memref<8x1xf32, #tpu.memory_space<vmem>>, vector<8x1xf32>
    %cst = arith.constant dense<0.000000e+00> : vector<8xf32>
    %79 = vector.multi_reduction <add>, %76, %cst [1] : vector<8x256xf32> to vector<8xf32>
    %80 = vector.shape_cast %79 : vector<8xf32> to vector<8x1xf32>
    %81 = arith.mulf %76, %76 : vector<8x256xf32>
    %cst_36 = arith.constant dense<0.000000e+00> : vector<8xf32>
    %82 = vector.multi_reduction <add>, %81, %cst_36 [1] : vector<8x256xf32> to vector<8xf32>
    %83 = vector.shape_cast %82 : vector<8xf32> to vector<8x1xf32>
    %cst_37 = arith.constant 3.906250e-03 : f32
    %84 = vector.broadcast %cst_37 : f32 to vector<8x1xf32>
    %85 = arith.mulf %80, %84 : vector<8x1xf32>
    %cst_38 = arith.constant 3.906250e-03 : f32
    %86 = vector.broadcast %cst_38 : f32 to vector<8x1xf32>
    %87 = arith.mulf %83, %86 : vector<8x1xf32>
    %88 = arith.mulf %85, %85 : vector<8x1xf32>
    %89 = arith.subf %87, %88 : vector<8x1xf32>
    %cst_39 = arith.constant 0.000000e+00 : f32
    %90 = vector.broadcast %cst_39 : f32 to vector<8x1xf32>
    %91 = arith.maximumf %89, %90 : vector<8x1xf32>
    %92 = vector.broadcast %85 : vector<8x1xf32> to vector<8x256xf32>
    %93 = arith.subf %76, %92 : vector<8x256xf32>
    %cst_40 = arith.constant 9.99999974E-6 : f32
    %94 = vector.broadcast %cst_40 : f32 to vector<8x1xf32>
    %95 = arith.addf %91, %94 : vector<8x1xf32>
    %96 = math.rsqrt %95 : vector<8x1xf32>
    %97 = vector.broadcast %96 : vector<8x1xf32> to vector<8x256xf32>
    %98 = arith.mulf %93, %97 : vector<8x256xf32>
    %99 = vector.broadcast %77 : vector<8x1xf32> to vector<8x256xf32>
    %100 = arith.mulf %98, %99 : vector<8x256xf32>
    %101 = vector.broadcast %78 : vector<8x1xf32> to vector<8x256xf32>
    %102 = arith.addf %100, %101 : vector<8x256xf32>
    %cst_41 = arith.constant 5.000000e-01 : f32
    %103 = vector.broadcast %cst_41 : f32 to vector<8x256xf32>
    %104 = arith.mulf %103, %102 : vector<8x256xf32>
    %cst_42 = arith.constant 0.707106769 : f32
    %105 = vector.broadcast %cst_42 : f32 to vector<8x256xf32>
    %106 = arith.mulf %102, %105 : vector<8x256xf32>
    %107 = math.erf %106 : vector<8x256xf32>
    %cst_43 = arith.constant 1.000000e+00 : f32
    %108 = vector.broadcast %cst_43 : f32 to vector<8x256xf32>
    %109 = arith.addf %108, %107 : vector<8x256xf32>
    %110 = arith.mulf %104, %109 : vector<8x256xf32>
    %c0_44 = arith.constant 0 : index
    %c0_45 = arith.constant 0 : index
    %111 = vector.load %arg6[%c0_44, %c0_45] : memref<16x8xf32, #tpu.memory_space<vmem>>, vector<16x8xf32>
    %cst_46 = arith.constant dense<0.000000e+00> : vector<16x256xf32>
    %112 = tpu.matmul %111, %110, %cst_46 {dimension_numbers = #tpu.dot_dimension_numbers<[1], [0], [0], [1], [0, 0, 1, 1], [], []>} : vector<16x8xf32>, vector<8x256xf32>, vector<16x256xf32> -> vector<16x256xf32>
    %c0_47 = arith.constant 0 : index
    %c0_48 = arith.constant 0 : index
    %113 = vector.load %arg7[%c0_47, %c0_48] : memref<16x1xf32, #tpu.memory_space<vmem>>, vector<16x1xf32>
    %c0_49 = arith.constant 0 : index
    %c0_50 = arith.constant 0 : index
    %114 = vector.load %arg8[%c0_49, %c0_50] : memref<16x1xf32, #tpu.memory_space<vmem>>, vector<16x1xf32>
    %cst_51 = arith.constant dense<0.000000e+00> : vector<16xf32>
    %115 = vector.multi_reduction <add>, %112, %cst_51 [1] : vector<16x256xf32> to vector<16xf32>
    %116 = vector.shape_cast %115 : vector<16xf32> to vector<16x1xf32>
    %117 = arith.mulf %112, %112 : vector<16x256xf32>
    %cst_52 = arith.constant dense<0.000000e+00> : vector<16xf32>
    %118 = vector.multi_reduction <add>, %117, %cst_52 [1] : vector<16x256xf32> to vector<16xf32>
    %119 = vector.shape_cast %118 : vector<16xf32> to vector<16x1xf32>
    %cst_53 = arith.constant 3.906250e-03 : f32
    %120 = vector.broadcast %cst_53 : f32 to vector<16x1xf32>
    %121 = arith.mulf %116, %120 : vector<16x1xf32>
    %cst_54 = arith.constant 3.906250e-03 : f32
    %122 = vector.broadcast %cst_54 : f32 to vector<16x1xf32>
    %123 = arith.mulf %119, %122 : vector<16x1xf32>
    %124 = arith.mulf %121, %121 : vector<16x1xf32>
    %125 = arith.subf %123, %124 : vector<16x1xf32>
    %cst_55 = arith.constant 0.000000e+00 : f32
    %126 = vector.broadcast %cst_55 : f32 to vector<16x1xf32>
    %127 = arith.maximumf %125, %126 : vector<16x1xf32>
    %128 = vector.broadcast %121 : vector<16x1xf32> to vector<16x256xf32>
    %129 = arith.subf %112, %128 : vector<16x256xf32>
    %cst_56 = arith.constant 9.99999974E-6 : f32
    %130 = vector.broadcast %cst_56 : f32 to vector<16x1xf32>
    %131 = arith.addf %127, %130 : vector<16x1xf32>
    %132 = math.rsqrt %131 : vector<16x1xf32>
    %133 = vector.broadcast %132 : vector<16x1xf32> to vector<16x256xf32>
    %134 = arith.mulf %129, %133 : vector<16x256xf32>
    %135 = vector.broadcast %113 : vector<16x1xf32> to vector<16x256xf32>
    %136 = arith.mulf %134, %135 : vector<16x256xf32>
    %137 = vector.broadcast %114 : vector<16x1xf32> to vector<16x256xf32>
    %138 = arith.addf %136, %137 : vector<16x256xf32>
    %cst_57 = arith.constant 5.000000e-01 : f32
    %139 = vector.broadcast %cst_57 : f32 to vector<16x256xf32>
    %140 = arith.mulf %139, %138 : vector<16x256xf32>
    %cst_58 = arith.constant 0.707106769 : f32
    %141 = vector.broadcast %cst_58 : f32 to vector<16x256xf32>
    %142 = arith.mulf %138, %141 : vector<16x256xf32>
    %143 = math.erf %142 : vector<16x256xf32>
    %cst_59 = arith.constant 1.000000e+00 : f32
    %144 = vector.broadcast %cst_59 : f32 to vector<16x256xf32>
    %145 = arith.addf %144, %143 : vector<16x256xf32>
    %146 = arith.mulf %140, %145 : vector<16x256xf32>
    %c0_60 = arith.constant 0 : index
    %c0_61 = arith.constant 0 : index
    %147 = vector.load %arg9[%c0_60, %c0_61] : memref<16x8xf32, #tpu.memory_space<vmem>>, vector<16x8xf32>
    %cst_62 = arith.constant dense<0.000000e+00> : vector<16x256xf32>
    %148 = tpu.matmul %147, %0, %cst_62 {dimension_numbers = #tpu.dot_dimension_numbers<[1], [0], [0], [1], [0, 0, 1, 1], [], []>} : vector<16x8xf32>, vector<8x256xf32>, vector<16x256xf32> -> vector<16x256xf32>
    %c0_63 = arith.constant 0 : index
    %c0_64 = arith.constant 0 : index
    %149 = vector.load %arg10[%c0_63, %c0_64] : memref<16x1xf32, #tpu.memory_space<vmem>>, vector<16x1xf32>
    %c0_65 = arith.constant 0 : index
    %c0_66 = arith.constant 0 : index
    %150 = vector.load %arg11[%c0_65, %c0_66] : memref<16x1xf32, #tpu.memory_space<vmem>>, vector<16x1xf32>
    %cst_67 = arith.constant dense<0.000000e+00> : vector<16xf32>
    %151 = vector.multi_reduction <add>, %148, %cst_67 [1] : vector<16x256xf32> to vector<16xf32>
    %152 = vector.shape_cast %151 : vector<16xf32> to vector<16x1xf32>
    %153 = arith.mulf %148, %148 : vector<16x256xf32>
    %cst_68 = arith.constant dense<0.000000e+00> : vector<16xf32>
    %154 = vector.multi_reduction <add>, %153, %cst_68 [1] : vector<16x256xf32> to vector<16xf32>
    %155 = vector.shape_cast %154 : vector<16xf32> to vector<16x1xf32>
    %cst_69 = arith.constant 3.906250e-03 : f32
    %156 = vector.broadcast %cst_69 : f32 to vector<16x1xf32>
    %157 = arith.mulf %152, %156 : vector<16x1xf32>
    %cst_70 = arith.constant 3.906250e-03 : f32
    %158 = vector.broadcast %cst_70 : f32 to vector<16x1xf32>
    %159 = arith.mulf %155, %158 : vector<16x1xf32>
    %160 = arith.mulf %157, %157 : vector<16x1xf32>
    %161 = arith.subf %159, %160 : vector<16x1xf32>
    %cst_71 = arith.constant 0.000000e+00 : f32
    %162 = vector.broadcast %cst_71 : f32 to vector<16x1xf32>
    %163 = arith.maximumf %161, %162 : vector<16x1xf32>
    %164 = vector.broadcast %157 : vector<16x1xf32> to vector<16x256xf32>
    %165 = arith.subf %148, %164 : vector<16x256xf32>
    %cst_72 = arith.constant 9.99999974E-6 : f32
    %166 = vector.broadcast %cst_72 : f32 to vector<16x1xf32>
    %167 = arith.addf %163, %166 : vector<16x1xf32>
    %168 = math.rsqrt %167 : vector<16x1xf32>
    %169 = vector.broadcast %168 : vector<16x1xf32> to vector<16x256xf32>
    %170 = arith.mulf %165, %169 : vector<16x256xf32>
    %171 = vector.broadcast %149 : vector<16x1xf32> to vector<16x256xf32>
    %172 = arith.mulf %170, %171 : vector<16x256xf32>
    %173 = vector.broadcast %150 : vector<16x1xf32> to vector<16x256xf32>
    %174 = arith.addf %172, %173 : vector<16x256xf32>
    %175 = arith.addf %146, %174 : vector<16x256xf32>
    %c0_73 = arith.constant 0 : index
    %c0_74 = arith.constant 0 : index
    %176 = vector.load %arg12[%c0_73, %c0_74] : memref<16x256xf32, #tpu.memory_space<vmem>>, vector<16x256xf32>
    tpu.vector_store %arg12[%c0_73, %c0_74], %175 {strides = array<i32>} : memref<16x256xf32, #tpu.memory_space<vmem>>, vector<16x256xf32>,
    return
  }
  func.func @transform_0(%arg0: i32) -> (i32, i32) {
    %c0_i32 = arith.constant 0 : i32
    %c0_i32_0 = arith.constant 0 : i32
    return %arg0, %c0_i32 : i32, i32
  }
  func.func @transform_1(%arg0: i32) -> (i32, i32, i32) {
    %c0_i32 = arith.constant 0 : i32
    %c0_i32_0 = arith.constant 0 : i32
    %c0_i32_1 = arith.constant 0 : i32
    %c0_i32_2 = arith.constant 0 : i32
    return %c0_i32, %c0_i32_0, %c0_i32_1 : i32, i32, i32
  }
  func.func @transform_2(%arg0: i32) -> (i32, i32, i32) {
    %c0_i32 = arith.constant 0 : i32
    %c0_i32_0 = arith.constant 0 : i32
    %c0_i32_1 = arith.constant 0 : i32
    %c0_i32_2 = arith.constant 0 : i32
    return %c0_i32, %c0_i32_0, %c0_i32_1 : i32, i32, i32
  }
  func.func @transform_3(%arg0: i32) -> (i32, i32) {
    %c0_i32 = arith.constant 0 : i32
    %c0_i32_0 = arith.constant 0 : i32
    %c0_i32_1 = arith.constant 0 : i32
    return %c0_i32, %c0_i32_0 : i32, i32
  }
  func.func @transform_4(%arg0: i32) -> (i32, i32) {
    %c0_i32 = arith.constant 0 : i32
    %c0_i32_0 = arith.constant 0 : i32
    %c0_i32_1 = arith.constant 0 : i32
    return %c0_i32, %c0_i32_0 : i32, i32
  }
  func.func @transform_5(%arg0: i32) -> (i32, i32) {
    %c0_i32 = arith.constant 0 : i32
    %c0_i32_0 = arith.constant 0 : i32
    %c0_i32_1 = arith.constant 0 : i32
    return %c0_i32, %c0_i32_0 : i32, i32
  }
  func.func @transform_6(%arg0: i32) -> (i32, i32) {
    %c0_i32 = arith.constant 0 : i32
    %c0_i32_0 = arith.constant 0 : i32
    %c0_i32_1 = arith.constant 0 : i32
    return %c0_i32, %c0_i32_0 : i32, i32
  }
  func.func @transform_7(%arg0: i32) -> (i32, i32) {
    %c0_i32 = arith.constant 0 : i32
    %c0_i32_0 = arith.constant 0 : i32
    %c0_i32_1 = arith.constant 0 : i32
    return %c0_i32, %c0_i32_0 : i32, i32
  }
  func.func @transform_8(%arg0: i32) -> (i32, i32) {
    %c0_i32 = arith.constant 0 : i32
    %c0_i32_0 = arith.constant 0 : i32
    %c0_i32_1 = arith.constant 0 : i32
    return %c0_i32, %c0_i32_0 : i32, i32
  }
  func.func @transform_9(%arg0: i32) -> (i32, i32) {
    %c0_i32 = arith.constant 0 : i32
    %c0_i32_0 = arith.constant 0 : i32
    %c0_i32_1 = arith.constant 0 : i32
    return %c0_i32, %c0_i32_0 : i32, i32
  }
  func.func @transform_10(%arg0: i32) -> (i32, i32) {
    %c0_i32 = arith.constant 0 : i32
    %c0_i32_0 = arith.constant 0 : i32
    %c0_i32_1 = arith.constant 0 : i32
    return %c0_i32, %c0_i32_0 : i32, i32
  }
  func.func @transform_11(%arg0: i32) -> (i32, i32) {
    %c0_i32 = arith.constant 0 : i32
    %c0_i32_0 = arith.constant 0 : i32
    return %arg0, %c0_i32 : i32, i32
  }
}

</mosaic_0001>

<llo_original>
// kernel: tpu_custom_call.1
$region0: #{tpu_custom_call.1}
  #allocation0 [shape = 'u32[]', space=smem, size = 0x4, offset = 0x4, fixed_abs, tag = 'smem constant byte address 0x4 - core index']
  #allocation1 [shape = 'u32[72,128]{1,0:T(1,128)}', space=vmem, size = 0x9000, scoped, tag = 'internal scratch']
  %s0 = inlined_call_operand.vmem [shape: f32[8,256], index: 0, kind: input, shape index: {}]
  %s1 = inlined_call_operand.vmem [shape: f32[4,1,256], index: 1, kind: input, shape index: {}]
  %s2 = inlined_call_operand.vmem [shape: f32[9,8,1], index: 2, kind: input, shape index: {}]
  %s3 = inlined_call_operand.vmem [shape: f32[8,1], index: 3, kind: input, shape index: {}]
  %s4 = inlined_call_operand.vmem [shape: f32[8,1], index: 4, kind: input, shape index: {}]
  %s5 = inlined_call_operand.vmem [shape: f32[16,8], index: 5, kind: input, shape index: {}]
  %s6 = inlined_call_operand.vmem [shape: f32[16,1], index: 6, kind: input, shape index: {}]
  %s7 = inlined_call_operand.vmem [shape: f32[16,1], index: 7, kind: input, shape index: {}]
  %s8 = inlined_call_operand.vmem [shape: f32[16,8], index: 8, kind: input, shape index: {}]
  %s9 = inlined_call_operand.vmem [shape: f32[16,1], index: 9, kind: input, shape index: {}]
  %s10 = inlined_call_operand.vmem [shape: f32[16,1], index: 10, kind: input, shape index: {}]
  %s11 = inlined_call_operand.hbm [shape: f32[16,256], index: 11, kind: output, shape index: {}]
  %s12 = sld [smem:[#allocation0]]
  $region54: #{tpu_custom_call.1} parent=0
    _
  %s14 = ssub.s32 1, %s12
  %s15 = scalar_select 0, %s14, %s12
  $region1: #{tpu_custom_call.1} parent=0
    #allocation2 [shape = 'u8[16384]{0}', space=vmem, size = 0x4000, scoped, tag = 'output window, operand 0, single buffered']
    #allocation3 [shape = 's32[1]{0}', space=sflag, size = 0x4, scoped, tag = 'scoped memory for tpu_custom_call.1']
    %16 = vsyncpa [#allocation3], 0
    // Predicated region
    $region2: #{tpu_custom_call.1} parent=1 // pred_check
      _
    $region3: #{tpu_custom_call.1} parent=1 // pred_check_branch
      %18 = sbr.rel (0) target = $region5
    $region4: #{tpu_custom_call.1} parent=1 // pred_region
      _
    $region5: #{tpu_custom_call.1} parent=1 // pred_fallthru
      _
    // Predicated region
    $region6: #{tpu_custom_call.1} parent=1 // pred_check
      _
    $region7: #{tpu_custom_call.1} parent=1 // pred_check_branch
      %20 = sbr.rel (0) target = $region9
    $region8: #{tpu_custom_call.1} parent=1 // pred_region
      _
    $region9: #{tpu_custom_call.1} parent=1 // pred_fallthru
      _
    // Predicated region
    $region10: #{tpu_custom_call.1} parent=1 // pred_check
      _
    $region11: #{tpu_custom_call.1} parent=1 // pred_check_branch
      %22 = sbr.rel (0) target = $region13
    $region12: #{tpu_custom_call.1} parent=1 // pred_region
      _
    $region13: #{tpu_custom_call.1} parent=1 // pred_fallthru
      _
    // Predicated region
    $region14: #{tpu_custom_call.1} parent=1 // pred_check
      _
    $region15: #{tpu_custom_call.1} parent=1 // pred_check_branch
      %24 = sbr.rel (0) target = $region17
    $region16: #{tpu_custom_call.1} parent=1 // pred_region
      _
    $region17: #{tpu_custom_call.1} parent=1 // pred_fallthru
      _
    // Predicated region
    $region18: #{tpu_custom_call.1} parent=1 // pred_check
      _
    $region19: #{tpu_custom_call.1} parent=1 // pred_check_branch
      %26 = sbr.rel (0) target = $region21
    $region20: #{tpu_custom_call.1} parent=1 // pred_region
      _
    $region21: #{tpu_custom_call.1} parent=1 // pred_fallthru
      _
    // Predicated region
    $region22: #{tpu_custom_call.1} parent=1 // pred_check
      _
    $region23: #{tpu_custom_call.1} parent=1 // pred_check_branch
      %28 = sbr.rel (0) target = $region25
    $region24: #{tpu_custom_call.1} parent=1 // pred_region
      _
    $region25: #{tpu_custom_call.1} parent=1 // pred_fallthru
      _
    // Predicated region
    $region26: #{tpu_custom_call.1} parent=1 // pred_check
      _
    $region27: #{tpu_custom_call.1} parent=1 // pred_check_branch
      %30 = sbr.rel (0) target = $region29
    $region28: #{tpu_custom_call.1} parent=1 // pred_region
      _
    $region29: #{tpu_custom_call.1} parent=1 // pred_fallthru
      _
    // Predicated region
    $region30: #{tpu_custom_call.1} parent=1 // pred_check
      _
    $region31: #{tpu_custom_call.1} parent=1 // pred_check_branch
      %32 = sbr.rel (0) target = $region33
    $region32: #{tpu_custom_call.1} parent=1 // pred_region
      _
    $region33: #{tpu_custom_call.1} parent=1 // pred_fallthru
      _
    // Predicated region
    $region34: #{tpu_custom_call.1} parent=1 // pred_check
      _
    $region35: #{tpu_custom_call.1} parent=1 // pred_check_branch
      %34 = sbr.rel (0) target = $region37
    $region36: #{tpu_custom_call.1} parent=1 // pred_region
      _
    $region37: #{tpu_custom_call.1} parent=1 // pred_fallthru
      _
    // Predicated region
    $region38: #{tpu_custom_call.1} parent=1 // pred_check
      _
    $region39: #{tpu_custom_call.1} parent=1 // pred_check_branch
      %36 = sbr.rel (0) target = $region41
    $region40: #{tpu_custom_call.1} parent=1 // pred_region
      _
    $region41: #{tpu_custom_call.1} parent=1 // pred_fallthru
      _
    // Predicated region
    $region42: #{tpu_custom_call.1} parent=1 // pred_check
      _
    $region43: #{tpu_custom_call.1} parent=1 // pred_check_branch
      %38 = sbr.rel (0) target = $region45
    $region44: #{tpu_custom_call.1} parent=1 // pred_region
      _
    $region45: #{tpu_custom_call.1} parent=1 // pred_fallthru
      _
    %v39 = vld [vmem:[%s0] sm:$0xff]
    %v40 = vld [vmem:[%s0 + $0x8] sm:$0xff]
    %v41 = vld [vmem:[%s1] sm:$0x3]
    %s42 = scalar_lea.vmem %s1, 2
    %v43 = vld [vmem:[%s42] sm:$0x3]
    %s44 = scalar_lea.vmem %s1, 4
    %v45 = vld [vmem:[%s44] sm:$0x3]
    %s46 = scalar_lea.vmem %s1, 6
    %v47 = vld [vmem:[%s46] sm:$0x3]
    %v48 = vld [vmem:[%s2] sm:$0xff]
    %49 = vrot.lane.b32.xlu0 %v39, 17
    %v50 = vpop.permute.xlu0 %49
    %51 = vrot.lane.b32.xlu0 %v40, 17
    %v52 = vpop.permute.xlu0 %51
    %v53 = vlaneseq
    %v54 = vand.u32 %v53, 127
    %vm55 = vcmp.lt.s32.totalorder %v54, 17
    %v56 = vsel %vm55, %v50, %v52
    %v57 = vsel %vm55, %v52, %v50
    %59 = vset.pattern.permute.xlu0 0
    %60 = vperm.xlu0 %59, %v48
    %v61 = vpop.permute.xlu0 %60
    %v63 = vmul.f32 %v61, %v57
    %v64 = vmul.f32 %v61, %v56
    %v66 = vperm.slane %v41, 0
    %v67 = vperm.slane %v41, 1
    %v70 = vmul.f32 %v63, %v66
    %v71 = vmul.f32 %v64, %v67
    %s72 = scalar_lea.vmem %s2, 8
    %v73 = vld [vmem:[%s72] sm:$0xff]
    %74 = vrot.lane.b32.xlu0 %v39, 16
    %v75 = vpop.permute.xlu0 %74
    %76 = vrot.lane.b32.xlu0 %v40, 16
    %v77 = vpop.permute.xlu0 %76
    %vm78 = vcmp.lt.s32.totalorder %v54, 16
    %v79 = vsel %vm78, %v75, %v77
    %v80 = vsel %vm78, %v77, %v75
    %82 = vset.pattern.permute.xlu0 0
    %83 = vperm.xlu0 %82, %v73
    %v84 = vpop.permute.xlu0 %83
    %v86 = vmul.f32 %v84, %v80
    %v87 = vmul.f32 %v84, %v79
    %v88 = vadd.f32 %v70, %v86
    %v89 = vadd.f32 %v71, %v87
    %s90 = scalar_lea.vmem %s2, 16
    %v91 = vld [vmem:[%s90] sm:$0xff]
    %92 = vrot.lane.b32.xlu0 %v39, 15
    %v93 = vpop.permute.xlu0 %92
    %94 = vrot.lane.b32.xlu0 %v40, 15
    %v95 = vpop.permute.xlu0 %94
    %vm96 = vcmp.lt.s32.totalorder %v54, 15
    %v97 = vsel %vm96, %v93, %v95
    %v98 = vsel %vm96, %v95, %v93
    %100 = vset.pattern.permute.xlu0 0
    %101 = vperm.xlu0 %100, %v91
    %v102 = vpop.permute.xlu0 %101
    %v104 = vmul.f32 %v102, %v98
    %v105 = vmul.f32 %v102, %v97
    %v107 = vperm.slane %v43, 0
    %v108 = vperm.slane %v43, 1
    %v111 = vmul.f32 %v104, %v107
    %v112 = vmul.f32 %v105, %v108
    %v113 = vadd.f32 %v88, %v111
    %v114 = vadd.f32 %v89, %v112
    %s115 = scalar_lea.vmem %s2, 24
    %v116 = vld [vmem:[%s115] sm:$0xff]
    %117 = vrot.lane.b32.xlu0 %v39, 1
    %v118 = vpop.permute.xlu0 %117
    %119 = vrot.lane.b32.xlu0 %v40, 1
    %v120 = vpop.permute.xlu0 %119
    %vm121 = vcmp.lt.s32.totalorder %v54, 1
    %v122 = vsel %vm121, %v118, %v120
    %v123 = vsel %vm121, %v120, %v118
    %125 = vset.pattern.permute.xlu0 0
    %126 = vperm.xlu0 %125, %v116
    %v127 = vpop.permute.xlu0 %126
    %v129 = vmul.f32 %v127, %v123
    %v130 = vmul.f32 %v127, %v122
    %v131 = vmul.f32 %v129, %v66
    %v132 = vmul.f32 %v130, %v67
    %s133 = scalar_lea.vmem %s2, 32
    %v134 = vld [vmem:[%s133] sm:$0xff]
    %136 = vset.pattern.permute.xlu0 0
    %137 = vperm.xlu0 %136, %v134
    %v138 = vpop.permute.xlu0 %137
    %v140 = vmul.f32 %v138, %v39
    %v141 = vmul.f32 %v138, %v40
    %v142 = vadd.f32 %v131, %v140
    %v143 = vadd.f32 %v132, %v141
    %s144 = scalar_lea.vmem %s2, 40
    %v145 = vld [vmem:[%s144] sm:$0xff]
    %146 = vrot.lane.b32.xlu0 %v39, 127
    %v147 = vpop.permute.xlu0 %146
    %148 = vrot.lane.b32.xlu0 %v40, 127
    %v149 = vpop.permute.xlu0 %148
    %vm150 = vcmp.lt.s32.totalorder %v54, 127
    %v151 = vsel %vm150, %v147, %v149
    %v152 = vsel %vm150, %v149, %v147
    %154 = vset.pattern.permute.xlu0 0
    %155 = vperm.xlu0 %154, %v145
    %v156 = vpop.permute.xlu0 %155
    %v158 = vmul.f32 %v156, %v151
    %v159 = vmul.f32 %v156, %v152
    %v160 = vmul.f32 %v158, %v107
    %v161 = vmul.f32 %v159, %v108
    %v162 = vadd.f32 %v142, %v160
    %v163 = vadd.f32 %v143, %v161
    %s164 = scalar_lea.vmem %s2, 48
    %v165 = vld [vmem:[%s164] sm:$0xff]
    %166 = vrot.lane.b32.xlu0 %v39, 113
    %v167 = vpop.permute.xlu0 %166
    %168 = vrot.lane.b32.xlu0 %v40, 113
    %v169 = vpop.permute.xlu0 %168
    %vm170 = vcmp.lt.s32.totalorder %v54, 113
    %v171 = vsel %vm170, %v167, %v169
    %v172 = vsel %vm170, %v169, %v167
    %174 = vset.pattern.permute.xlu0 0
    %175 = vperm.xlu0 %174, %v165
    %v176 = vpop.permute.xlu0 %175
    %v178 = vmul.f32 %v176, %v171
    %v179 = vmul.f32 %v176, %v172
    %v180 = vmul.f32 %v178, %v66
    %v181 = vmul.f32 %v179, %v67
    %s182 = scalar_lea.vmem %s2, 56
    %v183 = vld [vmem:[%s182] sm:$0xff]
    %184 = vrot.lane.b32.xlu0 %v39, 112
    %v185 = vpop.permute.xlu0 %184
    %186 = vrot.lane.b32.xlu0 %v40, 112
    %v187 = vpop.permute.xlu0 %186
    %vm188 = vcmp.lt.s32.totalorder %v54, 112
    %v189 = vsel %vm188, %v185, %v187
    %v190 = vsel %vm188, %v187, %v185
    %192 = vset.pattern.permute.xlu0 0
    %193 = vperm.xlu0 %192, %v183
    %v194 = vpop.permute.xlu0 %193
    %v196 = vmul.f32 %v194, %v189
    %v197 = vmul.f32 %v194, %v190
    %v198 = vadd.f32 %v180, %v196
    %v199 = vadd.f32 %v181, %v197
    %s200 = scalar_lea.vmem %s2, 64
    %v201 = vld [vmem:[%s200] sm:$0xff]
    %202 = vrot.lane.b32.xlu0 %v39, 111
    %v203 = vpop.permute.xlu0 %202
    %204 = vrot.lane.b32.xlu0 %v40, 111
    %v205 = vpop.permute.xlu0 %204
    %vm206 = vcmp.lt.s32.totalorder %v54, 111
    %v207 = vsel %vm206, %v203, %v205
    %v208 = vsel %vm206, %v205, %v203
    %210 = vset.pattern.permute.xlu0 0
    %211 = vperm.xlu0 %210, %v201
    %v212 = vpop.permute.xlu0 %211
    %v214 = vmul.f32 %v212, %v207
    %v215 = vmul.f32 %v212, %v208
    %v216 = vmul.f32 %v214, %v107
    %v217 = vmul.f32 %v215, %v108
    %v218 = vadd.f32 %v198, %v216
    %v219 = vadd.f32 %v199, %v217
    %v221 = vperm.slane %v45, 0
    %v222 = vperm.slane %v45, 1
    %v225 = vmul.f32 %v221, %v113
    %v226 = vmul.f32 %v222, %v114
    %v227 = vadd.f32 %v225, %v162
    %v228 = vadd.f32 %v226, %v163
    %v230 = vperm.slane %v47, 0
    %v231 = vperm.slane %v47, 1
    %v234 = vmul.f32 %v230, %v218
    %v235 = vmul.f32 %v231, %v219
    %v236 = vadd.f32 %v227, %v234
    %v237 = vadd.f32 %v228, %v235
    %v238 = vld [vmem:[%s3] sm:$0xff]
    %v239 = vld [vmem:[%s4] sm:$0xff]
    %v240 = vadd.f32 %v236, %v237
    %241 = vadd.xlane.f32.xlu0 %v240
    %v242 = vpop.xlane.xlu0 %241
    %v243 = vmul.f32 %v236, %v236
    %v244 = vmul.f32 %v237, %v237
    %v245 = vadd.f32 %v243, %v244
    %246 = vadd.xlane.f32.xlu0 %v245
    %v247 = vpop.xlane.xlu0 %246
    %v248 = vmul.f32 %v242, 0.00390625
    %v249 = vmul.f32 %v247, 0.00390625
    %v250 = vmul.f32 %v248, %v248
    %v251 = vsub.f32 %v249, %v250
    %v252 = vmax.f32 %v251, 0.0
    %v253 = vsub.f32 %v236, %v248
    %v254 = vsub.f32 %v237, %v248
    %v255 = vadd.f32 %v252, 1e-05
    %v256 = vrsqrt.pop %v255
    %v257 = vmul.f32 %v256, %v255
    %v258 = vmul.f32 %v257, %v256
    %v259 = vmul.f32 0.5, %v258
    %v260 = vsub.f32 1.5, %v259
    %v261 = vmul.f32 %v256, %v260
    %vm262 = vweird.f32 %v255
    %vm263 = vweird.f32 %v256
    %vm264 = vmor %vm262, %vm263
    %v265 = vsel %vm264, %v256, %v261
    %v266 = vmul.f32 %v253, %v265
    %v267 = vmul.f32 %v254, %v265
    %269 = vset.pattern.permute.xlu0 0
    %270 = vperm.xlu0 %269, %v238
    %v271 = vpop.permute.xlu0 %270
    %v273 = vmul.f32 %v266, %v271
    %v274 = vmul.f32 %v267, %v271
    %276 = vset.pattern.permute.xlu0 0
    %277 = vperm.xlu0 %276, %v239
    %v278 = vpop.permute.xlu0 %277
    %v280 = vadd.f32 %v273, %v278
    %v281 = vadd.f32 %v274, %v278
    %v282 = vmul.f32 %v280, 0.5
    %v283 = vmul.f32 %v281, 0.5
    %v284 = vmul.f32 %v280, 0.70710677
    %v285 = vmul.f32 %v281, 0.70710677
    %v286 = vmul.f32 %v284, %v284
    %v287 = vmin.f32 16.0, %v286
    %v288 = vmul.f32 %v287, 2.1237322e-06
    %v289 = vadd.f32 %v288, 0.00028619796
    %v290 = vmul.f32 %v287, %v289
    %v291 = vadd.f32 %v290, 0.0036580483
    %v292 = vmul.f32 %v287, %v291
    %v293 = vadd.f32 %v292, 0.05243302
    %v294 = vmul.f32 %v287, %v293
    %v295 = vadd.f32 %v294, 0.18741608
    %v296 = vmul.f32 %v287, %v295
    %v297 = vadd.f32 %v296, 1.1283791
    %v298 = vmul.f32 %v284, %v297
    %v299 = vmul.f32 %v287, 3.8918573e-05
    %v300 = vadd.f32 %v299, 0.001143296
    %v301 = vmul.f32 %v287, %v300
    %v302 = vadd.f32 %v301, 0.014752088
    %v303 = vmul.f32 %v287, %v302
    %v304 = vadd.f32 %v303, 0.112945676
    %v305 = vmul.f32 %v287, %v304
    %v306 = vadd.f32 %v305, 0.4994258
    %v307 = vmul.f32 %v287, %v306
    %v308 = vadd.f32 %v307, 1.0
    %v309 = vrcp.pop %v308
    %v310 = vmul.f32 %v308, %v309
    %v311 = vsub.f32 1.0, %v310
    %v312 = vmul.f32 %v309, %v311
    %v313 = vadd.f32 %v309, %v312
    %vm314 = vweird.f32 %v308
    %vm315 = vweird.f32 %v309
    %vm316 = vmor %vm314, %vm315
    %v317 = vsel %vm316, %v309, %v313
    %v318 = vand.u32 2147483647, %v308
    %vm319 = vcmp.eq.f32.partialorder %v318, 8.507059e+37
    %v320 = vand.u32 %v308, 2147483648
    %v321 = vor.u32 1.1754944e-38, %v320
    %v322 = vsel %vm319, %v321, %v317
    %v323 = vmul.f32 %v298, %v322
    %v324 = vmin.f32 %v323, 1.0
    %v325 = vmax.f32 %v324, -1.0
    %v326 = vmul.f32 %v285, %v285
    %v327 = vmin.f32 16.0, %v326
    %v328 = vmul.f32 %v327, 2.1237322e-06
    %v329 = vadd.f32 %v328, 0.00028619796
    %v330 = vmul.f32 %v327, %v329
    %v331 = vadd.f32 %v330, 0.0036580483
    %v332 = vmul.f32 %v327, %v331
    %v333 = vadd.f32 %v332, 0.05243302
    %v334 = vmul.f32 %v327, %v333
    %v335 = vadd.f32 %v334, 0.18741608
    %v336 = vmul.f32 %v327, %v335
    %v337 = vadd.f32 %v336, 1.1283791
    %v338 = vmul.f32 %v285, %v337
    %v339 = vmul.f32 %v327, 3.8918573e-05
    %v340 = vadd.f32 %v339, 0.001143296
    %v341 = vmul.f32 %v327, %v340
    %v342 = vadd.f32 %v341, 0.014752088
    %v343 = vmul.f32 %v327, %v342
    %v344 = vadd.f32 %v343, 0.112945676
    %v345 = vmul.f32 %v327, %v344
    %v346 = vadd.f32 %v345, 0.4994258
    %v347 = vmul.f32 %v327, %v346
    %v348 = vadd.f32 %v347, 1.0
    %v349 = vrcp.pop %v348
    %v350 = vmul.f32 %v348, %v349
    %v351 = vsub.f32 1.0, %v350
    %v352 = vmul.f32 %v349, %v351
    %v353 = vadd.f32 %v349, %v352
    %vm354 = vweird.f32 %v348
    %vm355 = vweird.f32 %v349
    %vm356 = vmor %vm354, %vm355
    %v357 = vsel %vm356, %v349, %v353
    %v358 = vand.u32 2147483647, %v348
    %vm359 = vcmp.eq.f32.partialorder %v358, 8.507059e+37
    %v360 = vand.u32 %v348, 2147483648
    %v361 = vor.u32 1.1754944e-38, %v360
    %v362 = vsel %vm359, %v361, %v357
    %v363 = vmul.f32 %v338, %v362
    %v364 = vmin.f32 %v363, 1.0
    %v365 = vmax.f32 %v364, -1.0
    %v366 = vadd.f32 %v325, 1.0
    %v367 = vadd.f32 %v365, 1.0
    %v368 = vmul.f32 %v282, %v366
    %v369 = vmul.f32 %v283, %v367
    %v370 = vld [vmem:[%s5] sm:$0xff]
    %v371 = vld [vmem:[%s5 + $0x8] sm:$0xff]
    %vm372 = vcmask 64512
    %v374 = vsel %vm372, %v370, 0
    %v377 = vsel %vm372, %v371, 0
    %379 = vmatpush.msra.mxu0 0.0
    %380 = vmatpush.msra.mxu0 0.0
    %381 = vmatpush.msra.mxu0 0.0
    %382 = vmatpush.msra.mxu0 0.0
    %383 = vmatpush.msra.mxu0 0.0
    %384 = vmatpush.msra.mxu0 0.0
    %385 = vmatpush.msra.mxu0 0.0
    %386 = vmatpush.msra.mxu0 0.0
    %387 = vmatpush.msra.mxu0 0.0
    %388 = vmatpush.msra.mxu0 0.0
    %389 = vmatpush.msra.mxu0 0.0
    %390 = vmatpush.msra.mxu0 0.0
    %391 = vmatpush.msra.mxu0 0.0
    %392 = vmatpush.msra.mxu0 0.0
    %393 = vmatpush.msra.mxu0 0.0
    %394 = vmatpush.msra.mxu0 %v368
    %395 = vmatmul.f32.gmra.mxu0 %v374
    %v396 = vpop.f32.mrf.mxu0
    %v397 = vadd.f32 0.0, %v396
    %398 = vmatmul.f32.gmra.mxu0 %v377
    %v399 = vpop.f32.mrf.mxu0
    %v400 = vadd.f32 0.0, %v399
    %401 = vdwg.mxu0
    %402 = vmatpush.msra.mxu0 0.0
    %403 = vmatpush.msra.mxu0 0.0
    %404 = vmatpush.msra.mxu0 0.0
    %405 = vmatpush.msra.mxu0 0.0
    %406 = vmatpush.msra.mxu0 0.0
    %407 = vmatpush.msra.mxu0 0.0
    %408 = vmatpush.msra.mxu0 0.0
    %409 = vmatpush.msra.mxu0 0.0
    %410 = vmatpush.msra.mxu0 0.0
    %411 = vmatpush.msra.mxu0 0.0
    %412 = vmatpush.msra.mxu0 0.0
    %413 = vmatpush.msra.mxu0 0.0
    %414 = vmatpush.msra.mxu0 0.0
    %415 = vmatpush.msra.mxu0 0.0
    %416 = vmatpush.msra.mxu0 0.0
    %417 = vmatpush.msra.mxu0 %v369
    %418 = vmatmul.f32.gmra.mxu0 %v374
    %v419 = vpop.f32.mrf.mxu0
    %v420 = vadd.f32 0.0, %v419
    %421 = vmatmul.f32.gmra.mxu0 %v377
    %v422 = vpop.f32.mrf.mxu0
    %v423 = vadd.f32 0.0, %v422
    %424 = vdwg.mxu0
    %v425 = vld [vmem:[%s6] sm:$0xff]
    %v426 = vld [vmem:[%s6 + $0x8] sm:$0xff]
    %v427 = vld [vmem:[%s7] sm:$0xff]
    %v428 = vld [vmem:[%s7 + $0x8] sm:$0xff]
    %v429 = vadd.f32 %v397, %v420
    %430 = vadd.xlane.f32.xlu0 %v429
    %v431 = vpop.xlane.xlu0 %430
    %v432 = vadd.f32 %v400, %v423
    %433 = vadd.xlane.f32.xlu0 %v432
    %v434 = vpop.xlane.xlu0 %433
    %v435 = vmul.f32 %v397, %v397
    %v436 = vmul.f32 %v420, %v420
    %v437 = vmul.f32 %v400, %v400
    %v438 = vmul.f32 %v423, %v423
    %v439 = vadd.f32 %v435, %v436
    %440 = vadd.xlane.f32.xlu0 %v439
    %v441 = vpop.xlane.xlu0 %440
    %v442 = vadd.f32 %v437, %v438
    %443 = vadd.xlane.f32.xlu0 %v442
    %v444 = vpop.xlane.xlu0 %443
    %v445 = vmul.f32 %v431, 0.00390625
    %v446 = vmul.f32 %v434, 0.00390625
    %v447 = vmul.f32 %v441, 0.00390625
    %v448 = vmul.f32 %v444, 0.00390625
    %v449 = vmul.f32 %v445, %v445
    %v450 = vmul.f32 %v446, %v446
    %v451 = vsub.f32 %v447, %v449
    %v452 = vsub.f32 %v448, %v450
    %v453 = vmax.f32 %v451, 0.0
    %v454 = vmax.f32 %v452, 0.0
    %v455 = vsub.f32 %v397, %v445
    %v456 = vsub.f32 %v420, %v445
    %v457 = vsub.f32 %v400, %v446
    %v458 = vsub.f32 %v423, %v446
    %v459 = vadd.f32 %v453, 1e-05
    %v460 = vadd.f32 %v454, 1e-05
    %v461 = vrsqrt.pop %v459
    %v462 = vmul.f32 %v461, %v459
    %v463 = vmul.f32 %v462, %v461
    %v464 = vmul.f32 0.5, %v463
    %v465 = vsub.f32 1.5, %v464
    %v466 = vmul.f32 %v461, %v465
    %vm467 = vweird.f32 %v459
    %vm468 = vweird.f32 %v461
    %vm469 = vmor %vm467, %vm468
    %v470 = vsel %vm469, %v461, %v466
    %v471 = vrsqrt.pop %v460
    %v472 = vmul.f32 %v471, %v460
    %v473 = vmul.f32 %v472, %v471
    %v474 = vmul.f32 0.5, %v473
    %v475 = vsub.f32 1.5, %v474
    %v476 = vmul.f32 %v471, %v475
    %vm477 = vweird.f32 %v460
    %vm478 = vweird.f32 %v471
    %vm479 = vmor %vm477, %vm478
    %v480 = vsel %vm479, %v471, %v476
    %v481 = vmul.f32 %v455, %v470
    %v482 = vmul.f32 %v456, %v470
    %v483 = vmul.f32 %v457, %v480
    %v484 = vmul.f32 %v458, %v480
    %486 = vset.pattern.permute.xlu0 0
    %487 = vperm.xlu0 %486, %v425
    %v488 = vpop.permute.xlu0 %487
    %491 = vset.pattern.permute.xlu0 0
    %492 = vperm.xlu0 %491, %v426
    %v493 = vpop.permute.xlu0 %492
    %v495 = vmul.f32 %v481, %v488
    %v496 = vmul.f32 %v482, %v488
    %v497 = vmul.f32 %v483, %v493
    %v498 = vmul.f32 %v484, %v493
    %500 = vset.pattern.permute.xlu0 0
    %501 = vperm.xlu0 %500, %v427
    %v502 = vpop.permute.xlu0 %501
    %505 = vset.pattern.permute.xlu0 0
    %506 = vperm.xlu0 %505, %v428
    %v507 = vpop.permute.xlu0 %506
    %v509 = vadd.f32 %v495, %v502
    %v510 = vadd.f32 %v496, %v502
    %v511 = vadd.f32 %v497, %v507
    %v512 = vadd.f32 %v498, %v507
    %v513 = vmul.f32 %v509, 0.5
    %v514 = vmul.f32 %v510, 0.5
    %v515 = vmul.f32 %v511, 0.5
    %v516 = vmul.f32 %v512, 0.5
    %v517 = vmul.f32 %v509, 0.70710677
    %v518 = vmul.f32 %v510, 0.70710677
    %v519 = vmul.f32 %v511, 0.70710677
    %v520 = vmul.f32 %v512, 0.70710677
    %v521 = vmul.f32 %v517, %v517
    %v522 = vmin.f32 16.0, %v521
    %v523 = vmul.f32 %v522, 2.1237322e-06
    %v524 = vadd.f32 %v523, 0.00028619796
    %v525 = vmul.f32 %v522, %v524
    %v526 = vadd.f32 %v525, 0.0036580483
    %v527 = vmul.f32 %v522, %v526
    %v528 = vadd.f32 %v527, 0.05243302
    %v529 = vmul.f32 %v522, %v528
    %v530 = vadd.f32 %v529, 0.18741608
    %v531 = vmul.f32 %v522, %v530
    %v532 = vadd.f32 %v531, 1.1283791
    %v533 = vmul.f32 %v517, %v532
    %v534 = vmul.f32 %v522, 3.8918573e-05
    %v535 = vadd.f32 %v534, 0.001143296
    %v536 = vmul.f32 %v522, %v535
    %v537 = vadd.f32 %v536, 0.014752088
    %v538 = vmul.f32 %v522, %v537
    %v539 = vadd.f32 %v538, 0.112945676
    %v540 = vmul.f32 %v522, %v539
    %v541 = vadd.f32 %v540, 0.4994258
    %v542 = vmul.f32 %v522, %v541
    %v543 = vadd.f32 %v542, 1.0
    %v544 = vrcp.pop %v543
    %v545 = vmul.f32 %v543, %v544
    %v546 = vsub.f32 1.0, %v545
    %v547 = vmul.f32 %v544, %v546
    %v548 = vadd.f32 %v544, %v547
    %vm549 = vweird.f32 %v543
    %vm550 = vweird.f32 %v544
    %vm551 = vmor %vm549, %vm550
    %v552 = vsel %vm551, %v544, %v548
    %v553 = vand.u32 2147483647, %v543
    %vm554 = vcmp.eq.f32.partialorder %v553, 8.507059e+37
    %v555 = vand.u32 %v543, 2147483648
    %v556 = vor.u32 1.1754944e-38, %v555
    %v557 = vsel %vm554, %v556, %v552
    %v558 = vmul.f32 %v533, %v557
    %v559 = vmin.f32 %v558, 1.0
    %v560 = vmax.f32 %v559, -1.0
    %v561 = vmul.f32 %v518, %v518
    %v562 = vmin.f32 16.0, %v561
    %v563 = vmul.f32 %v562, 2.1237322e-06
    %v564 = vadd.f32 %v563, 0.00028619796
    %v565 = vmul.f32 %v562, %v564
    %v566 = vadd.f32 %v565, 0.0036580483
    %v567 = vmul.f32 %v562, %v566
    %v568 = vadd.f32 %v567, 0.05243302
    %v569 = vmul.f32 %v562, %v568
    %v570 = vadd.f32 %v569, 0.18741608
    %v571 = vmul.f32 %v562, %v570
    %v572 = vadd.f32 %v571, 1.1283791
    %v573 = vmul.f32 %v518, %v572
    %v574 = vmul.f32 %v562, 3.8918573e-05
    %v575 = vadd.f32 %v574, 0.001143296
    %v576 = vmul.f32 %v562, %v575
    %v577 = vadd.f32 %v576, 0.014752088
    %v578 = vmul.f32 %v562, %v577
    %v579 = vadd.f32 %v578, 0.112945676
    %v580 = vmul.f32 %v562, %v579
    %v581 = vadd.f32 %v580, 0.4994258
    %v582 = vmul.f32 %v562, %v581
    %v583 = vadd.f32 %v582, 1.0
    %v584 = vrcp.pop %v583
    %v585 = vmul.f32 %v583, %v584
    %v586 = vsub.f32 1.0, %v585
    %v587 = vmul.f32 %v584, %v586
    %v588 = vadd.f32 %v584, %v587
    %vm589 = vweird.f32 %v583
    %vm590 = vweird.f32 %v584
    %vm591 = vmor %vm589, %vm590
    %v592 = vsel %vm591, %v584, %v588
    %v593 = vand.u32 2147483647, %v583
    %vm594 = vcmp.eq.f32.partialorder %v593, 8.507059e+37
    %v595 = vand.u32 %v583, 2147483648
    %v596 = vor.u32 1.1754944e-38, %v595
    %v597 = vsel %vm594, %v596, %v592
    %v598 = vmul.f32 %v573, %v597
    %v599 = vmin.f32 %v598, 1.0
    %v600 = vmax.f32 %v599, -1.0
    %v601 = vmul.f32 %v519, %v519
    %v602 = vmin.f32 16.0, %v601
    %v603 = vmul.f32 %v602, 2.1237322e-06
    %v604 = vadd.f32 %v603, 0.00028619796
    %v605 = vmul.f32 %v602, %v604
    %v606 = vadd.f32 %v605, 0.0036580483
    %v607 = vmul.f32 %v602, %v606
    %v608 = vadd.f32 %v607, 0.05243302
    %v609 = vmul.f32 %v602, %v608
    %v610 = vadd.f32 %v609, 0.18741608
    %v611 = vmul.f32 %v602, %v610
    %v612 = vadd.f32 %v611, 1.1283791
    %v613 = vmul.f32 %v519, %v612
    %v614 = vmul.f32 %v602, 3.8918573e-05
    %v615 = vadd.f32 %v614, 0.001143296
    %v616 = vmul.f32 %v602, %v615
    %v617 = vadd.f32 %v616, 0.014752088
    %v618 = vmul.f32 %v602, %v617
    %v619 = vadd.f32 %v618, 0.112945676
    %v620 = vmul.f32 %v602, %v619
    %v621 = vadd.f32 %v620, 0.4994258
    %v622 = vmul.f32 %v602, %v621
    %v623 = vadd.f32 %v622, 1.0
    %v624 = vrcp.pop %v623
    %v625 = vmul.f32 %v623, %v624
    %v626 = vsub.f32 1.0, %v625
    %v627 = vmul.f32 %v624, %v626
    %v628 = vadd.f32 %v624, %v627
    %vm629 = vweird.f32 %v623
    %vm630 = vweird.f32 %v624
    %vm631 = vmor %vm629, %vm630
    %v632 = vsel %vm631, %v624, %v628
    %v633 = vand.u32 2147483647, %v623
    %vm634 = vcmp.eq.f32.partialorder %v633, 8.507059e+37
    %v635 = vand.u32 %v623, 2147483648
    %v636 = vor.u32 1.1754944e-38, %v635
    %v637 = vsel %vm634, %v636, %v632
    %v638 = vmul.f32 %v613, %v637
    %v639 = vmin.f32 %v638, 1.0
    %v640 = vmax.f32 %v639, -1.0
    %v641 = vmul.f32 %v520, %v520
    %v642 = vmin.f32 16.0, %v641
    %v643 = vmul.f32 %v642, 2.1237322e-06
    %v644 = vadd.f32 %v643, 0.00028619796
    %v645 = vmul.f32 %v642, %v644
    %v646 = vadd.f32 %v645, 0.0036580483
    %v647 = vmul.f32 %v642, %v646
    %v648 = vadd.f32 %v647, 0.05243302
    %v649 = vmul.f32 %v642, %v648
    %v650 = vadd.f32 %v649, 0.18741608
    %v651 = vmul.f32 %v642, %v650
    %v652 = vadd.f32 %v651, 1.1283791
    %v653 = vmul.f32 %v520, %v652
    %v654 = vmul.f32 %v642, 3.8918573e-05
    %v655 = vadd.f32 %v654, 0.001143296
    %v656 = vmul.f32 %v642, %v655
    %v657 = vadd.f32 %v656, 0.014752088
    %v658 = vmul.f32 %v642, %v657
    %v659 = vadd.f32 %v658, 0.112945676
    %v660 = vmul.f32 %v642, %v659
    %v661 = vadd.f32 %v660, 0.4994258
    %v662 = vmul.f32 %v642, %v661
    %v663 = vadd.f32 %v662, 1.0
    %v664 = vrcp.pop %v663
    %v665 = vmul.f32 %v663, %v664
    %v666 = vsub.f32 1.0, %v665
    %v667 = vmul.f32 %v664, %v666
    %v668 = vadd.f32 %v664, %v667
    %vm669 = vweird.f32 %v663
    %vm670 = vweird.f32 %v664
    %vm671 = vmor %vm669, %vm670
    %v672 = vsel %vm671, %v664, %v668
    %v673 = vand.u32 2147483647, %v663
    %vm674 = vcmp.eq.f32.partialorder %v673, 8.507059e+37
    %v675 = vand.u32 %v663, 2147483648
    %v676 = vor.u32 1.1754944e-38, %v675
    %v677 = vsel %vm674, %v676, %v672
    %v678 = vmul.f32 %v653, %v677
    %v679 = vmin.f32 %v678, 1.0
    %v680 = vmax.f32 %v679, -1.0
    %v681 = vadd.f32 %v560, 1.0
    %v682 = vadd.f32 %v600, 1.0
    %v683 = vadd.f32 %v640, 1.0
    %v684 = vadd.f32 %v680, 1.0
    %v685 = vmul.f32 %v513, %v681
    %v686 = vmul.f32 %v514, %v682
    %v687 = vmul.f32 %v515, %v683
    %v688 = vmul.f32 %v516, %v684
    %v689 = vld [vmem:[%s8] sm:$0xff]
    %v690 = vld [vmem:[%s8 + $0x8] sm:$0xff]
    %v692 = vsel %vm372, %v689, 0
    %v695 = vsel %vm372, %v690, 0
    %697 = vmatpush.msra.mxu0 0.0
    %698 = vmatpush.msra.mxu0 0.0
    %699 = vmatpush.msra.mxu0 0.0
    %700 = vmatpush.msra.mxu0 0.0
    %701 = vmatpush.msra.mxu0 0.0
    %702 = vmatpush.msra.mxu0 0.0
    %703 = vmatpush.msra.mxu0 0.0
    %704 = vmatpush.msra.mxu0 0.0
    %705 = vmatpush.msra.mxu0 0.0
    %706 = vmatpush.msra.mxu0 0.0
    %707 = vmatpush.msra.mxu0 0.0
    %708 = vmatpush.msra.mxu0 0.0
    %709 = vmatpush.msra.mxu0 0.0
    %710 = vmatpush.msra.mxu0 0.0
    %711 = vmatpush.msra.mxu0 0.0
    %712 = vmatpush.msra.mxu0 %v39
    %713 = vmatmul.f32.gmra.mxu0 %v692
    %v714 = vpop.f32.mrf.mxu0
    %v715 = vadd.f32 0.0, %v714
    %716 = vmatmul.f32.gmra.mxu0 %v695
    %v717 = vpop.f32.mrf.mxu0
    %v718 = vadd.f32 0.0, %v717
    %719 = vdwg.mxu0
    %720 = vmatpush.msra.mxu0 0.0
    %721 = vmatpush.msra.mxu0 0.0
    %722 = vmatpush.msra.mxu0 0.0
    %723 = vmatpush.msra.mxu0 0.0
    %724 = vmatpush.msra.mxu0 0.0
    %725 = vmatpush.msra.mxu0 0.0
    %726 = vmatpush.msra.mxu0 0.0
    %727 = vmatpush.msra.mxu0 0.0
    %728 = vmatpush.msra.mxu0 0.0
    %729 = vmatpush.msra.mxu0 0.0
    %730 = vmatpush.msra.mxu0 0.0
    %731 = vmatpush.msra.mxu0 0.0
    %732 = vmatpush.msra.mxu0 0.0
    %733 = vmatpush.msra.mxu0 0.0
    %734 = vmatpush.msra.mxu0 0.0
    %735 = vmatpush.msra.mxu0 %v40
    %736 = vmatmul.f32.gmra.mxu0 %v692
    %v737 = vpop.f32.mrf.mxu0
    %v738 = vadd.f32 0.0, %v737
    %739 = vmatmul.f32.gmra.mxu0 %v695
    %v740 = vpop.f32.mrf.mxu0
    %v741 = vadd.f32 0.0, %v740
    %742 = vdwg.mxu0
    %v743 = vld [vmem:[%s9] sm:$0xff]
    %v744 = vld [vmem:[%s9 + $0x8] sm:$0xff]
    %v745 = vld [vmem:[%s10] sm:$0xff]
    %v746 = vld [vmem:[%s10 + $0x8] sm:$0xff]
    %v747 = vadd.f32 %v715, %v738
    %748 = vadd.xlane.f32.xlu0 %v747
    %v749 = vpop.xlane.xlu0 %748
    %v750 = vadd.f32 %v718, %v741
    %751 = vadd.xlane.f32.xlu0 %v750
    %v752 = vpop.xlane.xlu0 %751
    %v753 = vmul.f32 %v715, %v715
    %v754 = vmul.f32 %v738, %v738
    %v755 = vmul.f32 %v718, %v718
    %v756 = vmul.f32 %v741, %v741
    %v757 = vadd.f32 %v753, %v754
    %758 = vadd.xlane.f32.xlu0 %v757
    %v759 = vpop.xlane.xlu0 %758
    %v760 = vadd.f32 %v755, %v756
    %761 = vadd.xlane.f32.xlu0 %v760
    %v762 = vpop.xlane.xlu0 %761
    %v763 = vmul.f32 %v749, 0.00390625
    %v764 = vmul.f32 %v752, 0.00390625
    %v765 = vmul.f32 %v759, 0.00390625
    %v766 = vmul.f32 %v762, 0.00390625
    %v767 = vmul.f32 %v763, %v763
    %v768 = vmul.f32 %v764, %v764
    %v769 = vsub.f32 %v765, %v767
    %v770 = vsub.f32 %v766, %v768
    %v771 = vmax.f32 %v769, 0.0
    %v772 = vmax.f32 %v770, 0.0
    %v773 = vsub.f32 %v715, %v763
    %v774 = vsub.f32 %v738, %v763
    %v775 = vsub.f32 %v718, %v764
    %v776 = vsub.f32 %v741, %v764
    %v777 = vadd.f32 %v771, 1e-05
    %v778 = vadd.f32 %v772, 1e-05
    %v779 = vrsqrt.pop %v777
    %v780 = vmul.f32 %v779, %v777
    %v781 = vmul.f32 %v780, %v779
    %v782 = vmul.f32 0.5, %v781
    %v783 = vsub.f32 1.5, %v782
    %v784 = vmul.f32 %v779, %v783
    %vm785 = vweird.f32 %v777
    %vm786 = vweird.f32 %v779
    %vm787 = vmor %vm785, %vm786
    %v788 = vsel %vm787, %v779, %v784
    %v789 = vrsqrt.pop %v778
    %v790 = vmul.f32 %v789, %v778
    %v791 = vmul.f32 %v790, %v789
    %v792 = vmul.f32 0.5, %v791
    %v793 = vsub.f32 1.5, %v792
    %v794 = vmul.f32 %v789, %v793
    %vm795 = vweird.f32 %v778
    %vm796 = vweird.f32 %v789
    %vm797 = vmor %vm795, %vm796
    %v798 = vsel %vm797, %v789, %v794
    %v799 = vmul.f32 %v773, %v788
    %v800 = vmul.f32 %v774, %v788
    %v801 = vmul.f32 %v775, %v798
    %v802 = vmul.f32 %v776, %v798
    %804 = vset.pattern.permute.xlu0 0
    %805 = vperm.xlu0 %804, %v743
    %v806 = vpop.permute.xlu0 %805
    %809 = vset.pattern.permute.xlu0 0
    %810 = vperm.xlu0 %809, %v744
    %v811 = vpop.permute.xlu0 %810
    %v813 = vmul.f32 %v799, %v806
    %v814 = vmul.f32 %v800, %v806
    %v815 = vmul.f32 %v801, %v811
    %v816 = vmul.f32 %v802, %v811
    %818 = vset.pattern.permute.xlu0 0
    %819 = vperm.xlu0 %818, %v745
    %v820 = vpop.permute.xlu0 %819
    %823 = vset.pattern.permute.xlu0 0
    %824 = vperm.xlu0 %823, %v746
    %v825 = vpop.permute.xlu0 %824
    %v827 = vadd.f32 %v813, %v820
    %v828 = vadd.f32 %v814, %v820
    %v829 = vadd.f32 %v815, %v825
    %v830 = vadd.f32 %v816, %v825
    %v831 = vadd.f32 %v685, %v827
    %v832 = vadd.f32 %v686, %v828
    %v833 = vadd.f32 %v687, %v829
    %v834 = vadd.f32 %v688, %v830
    %835 = vst [vmem:[#allocation2] sm:$0xff] %v831
    %836 = vst [vmem:[#allocation2 + $0x8] sm:$0xff] %v832
    %837 = vst [vmem:[#allocation2 + $0x10] sm:$0xff] %v833
    %838 = vst [vmem:[#allocation2 + $0x18] sm:$0xff] %v834
    // Predicated region
    $region46: #{tpu_custom_call.1} parent=1 // pred_check
      _
    $region47: #{tpu_custom_call.1} parent=1 // pred_check_branch
      %840 = sbr.rel (0) target = $region49
    $region48: #{tpu_custom_call.1} parent=1 // pred_region
      %842 = vsyncadd [#allocation3], 0
      %s843 = sshll.u32 [#allocation2], 4
      %s844 = int_to_ptr.vmem [resolvable:$true] %s843
      %s845 = sshll.u32 %s11, 4
      %s846 = int_to_ptr.hbm [resolvable:$true] %s845
      %851 = dma.vmem_to_hbm [thread:$0]  %s844, 512, %s846, [#allocation3], 256, 256, 16
    $region49: #{tpu_custom_call.1} parent=1 // pred_fallthru
      _
    // Predicated region
    $region50: #{tpu_custom_call.1} parent=1 // pred_check
      _
    $region51: #{tpu_custom_call.1} parent=1 // pred_check_branch
      %853 = sbr.rel (0) target = $region53
    $region52: #{tpu_custom_call.1} parent=1 // pred_region
      %855 = dma.done [#allocation3], 512
    $region53: #{tpu_custom_call.1} parent=1 // pred_fallthru
      _
    %856 = vsyncpa [#allocation3], 1

</llo_original>
